<compile_context>
chip_gen: v5e
topology: v5e:2x2
jax: 0.10.0
libtpu: 0.0.40
codegen_flags: <defaults>
</compile_context>

<pallas_src>
import jax
import jax.numpy as jnp
from jax.experimental import pallas as pl
from jax.experimental.pallas import tpu as pltpu

NUM_LAYERS = 8
IN_FEATURES = 28 * 28          # 784
IN_PADDED = 896                # 7 * 128 (lane-aligned K)
HIDDEN = 512
OUT_FEATURES = 10
OUT_PADDED = 128               # lane-dense output block


# ----------------------------------------------------------------------------
# Kernel: one batch tile of the folded affine map  out = x @ W_eff + b_eff
# ----------------------------------------------------------------------------
def _affine_kernel(x_ref, w_ref, b_ref, out_ref):
    out_ref[...] = (
        jnp.dot(x_ref[...], w_ref[...], preferred_element_type=jnp.float32)
        + b_ref[...]
    ).astype(out_ref.dtype)


def _choose_batch_tile(b):
    if b >= 1024:
        return 512             # fewer per-step overheads once compute-bound
    if b >= 512:
        return 256
    if b >= 256:
        return 128             # grid >= 2 -> both v7x TensorCores get work
    if b >= 128:
        return 128
    return max(8, ((b + 7) // 8) * 8)   # tiny batch: one sublane-aligned tile


# ----------------------------------------------------------------------------
# One-time parameter preparation (hoisted OUT of the jitted forward).
# params: list of (W, b) with W shape (in, out) (torch weight transposed) and
# b shape (1, out).  No activations => the chain folds exactly.
# ----------------------------------------------------------------------------
def fold_params(params):
    hi = jax.lax.Precision.HIGHEST
    w_eff = params[0][0].astype(jnp.float32)          # (784, 512)
    b_eff = params[0][1].astype(jnp.float32)          # (1, 512)
    for w, b in params[1:]:
        w = w.astype(jnp.float32)
        b = b.astype(jnp.float32)
        w_eff = jnp.dot(w_eff, w, precision=hi)
        b_eff = jnp.dot(b_eff, w, precision=hi) + b
    # Zero-pad to lane-aligned shapes (exact-zero contributions).
    w_pad = jnp.pad(w_eff, ((0, IN_PADDED - IN_FEATURES),
                            (0, OUT_PADDED - OUT_FEATURES)))   # (896, 128)
    b_pad = jnp.pad(b_eff, ((0, 0), (0, OUT_PADDED - OUT_FEATURES)))  # (1, 128)
    return w_pad, b_pad


# ----------------------------------------------------------------------------
# Jitted forward: pad x, launch the batch-tiled Pallas call, slice the result.
# ----------------------------------------------------------------------------
@jax.jit
def net_forward(x_nchw, w_pad, b_pad):
    """x_nchw: (B, 1, 28, 28) f32; w_pad: (896, 128); b_pad: (1, 128).
    Returns (B, 10) f32."""
    b = x_nchw.shape[0]
    x = x_nchw.reshape(b, IN_FEATURES).astype(jnp.float32)

    b_tile = _choose_batch_tile(b)
    rows = pl.cdiv(b, b_tile) * b_tile
    x = jnp.pad(x, ((0, rows - b), (0, IN_PADDED - IN_FEATURES)))

    cost = pl.CostEstimate(
        flops=2 * rows * IN_PADDED * OUT_PADDED,
        transcendentals=0,
        bytes_accessed=4 * (rows * IN_PADDED            # x
                            + IN_PADDED * OUT_PADDED    # W_eff
                            + OUT_PADDED                # b_eff
                            + rows * OUT_PADDED),       # out
    )

    const2 = lambda i: (0, 0)
    out = pl.pallas_call(
        _affine_kernel,
        out_shape=jax.ShapeDtypeStruct((rows, OUT_PADDED), jnp.float32),
        grid=(rows // b_tile,),
        in_specs=[
            pl.BlockSpec((b_tile, IN_PADDED), lambda i: (i, 0)),   # x tile
            pl.BlockSpec((IN_PADDED, OUT_PADDED), const2),         # W_eff (resident)
            pl.BlockSpec((1, OUT_PADDED), const2),                 # b_eff (resident)
        ],
        out_specs=pl.BlockSpec((b_tile, OUT_PADDED), lambda i: (i, 0)),
        compiler_params=pltpu.CompilerParams(
            dimension_semantics=("parallel",),
            vmem_limit_bytes=24 * 1024 * 1024,
        ),
        cost_estimate=cost,
    )(x, w_pad, b_pad)

    return out[:b, :OUT_FEATURES]


# ----------------------------------------------------------------------------
# Param init (mimics torch.nn.Linear default U(-1/sqrt(fan_in), 1/sqrt(fan_in)))
# and a pure-JAX layer-by-layer reference for correctness checking.
# ----------------------------------------------------------------------------
def init_params(key):
    dims = [IN_FEATURES] + [HIDDEN] * (NUM_LAYERS - 1) + [OUT_FEATURES]
    params = []
    for i in range(NUM_LAYERS):
        fan_in, fan_out = dims[i], dims[i + 1]
        key, kw, kb = jax.random.split(key, 3)
        bound = 1.0 / jnp.sqrt(jnp.float32(fan_in))
        w = jax.random.uniform(kw, (fan_in, fan_out), jnp.float32,
                               minval=-bound, maxval=bound)   # (in, out)
        bias = jax.random.uniform(kb, (1, fan_out), jnp.float32,
                                  minval=-bound, maxval=bound)
        params.append((w, bias))
    return params


def reference_forward(x_nchw, params):
    """Faithful layer-by-layer f32 forward (matches the torch module)."""
    b = x_nchw.shape[0]
    h = x_nchw.reshape(b, IN_FEATURES).astype(jnp.float32)
    for w, bias in params:
        h = jnp.dot(h, w, precision=jax.lax.Precision.HIGHEST) + bias
    return h


if __name__ == "__main__":
    key = jax.random.PRNGKey(0)
    key, kx = jax.random.split(key)

    batch = 2
    x = jax.random.normal(kx, (batch, 1, 28, 28), jnp.float32)  # NCHW input
    params = init_params(key)

    # One-time packing / folding (hoisted out of the jitted forward).
    w_pad, b_pad = fold_params(params)
    w_pad = jax.block_until_ready(w_pad)

    out = jax.block_until_ready(net_forward(x, w_pad, b_pad))

    ref = reference_forward(x, params)
    assert out.shape == (batch, OUT_FEATURES), out.shape
    max_err = float(jnp.max(jnp.abs(out - ref)))
    assert max_err < 1e-4, max_err

    print("KERNEL_OK")
</pallas_src>

<mosaic_0001>
module attributes {stable_mosaic.version = 11 : i64} {
  func.func @_affine_kernel(%arg0: i32, %arg1: memref<8x896xf32, #tpu.memory_space<vmem>>, %arg2: memref<896x128xf32, #tpu.memory_space<vmem>>, %arg3: memref<1x128xf32, #tpu.memory_space<vmem>>, %arg4: memref<8x128xf32, #tpu.memory_space<vmem>>) attributes {dimension_semantics = [#tpu.dimension_semantics<parallel>], iteration_bounds = array<i64: 1>, scalar_prefetch = 0 : i64, scratch_operands = 0 : i64, tpu.core_type = #tpu.core_type<tc>, window_params = [{transform_indices = @transform_0, window_bounds = array<i64: 8, 896>}, {pipeline_mode = #tpu.pipeline_mode<synchronous>, transform_indices = @transform_1, window_bounds = array<i64: 896, 128>}, {pipeline_mode = #tpu.pipeline_mode<synchronous>, transform_indices = @transform_2, window_bounds = array<i64: 1, 128>}, {transform_indices = @transform_3, window_bounds = array<i64: 8, 128>}]} {
    %c0 = arith.constant 0 : index
    %c0_0 = arith.constant 0 : index
    %0 = vector.load %arg1[%c0, %c0_0] : memref<8x896xf32, #tpu.memory_space<vmem>>, vector<8x896xf32>
    %c0_1 = arith.constant 0 : index
    %c0_2 = arith.constant 0 : index
    %1 = vector.load %arg2[%c0_1, %c0_2] : memref<896x128xf32, #tpu.memory_space<vmem>>, vector<896x128xf32>
    %cst = arith.constant dense<0.000000e+00> : vector<8x128xf32>
    %2 = tpu.matmul %0, %1, %cst {dimension_numbers = #tpu.dot_dimension_numbers<[1], [0], [0], [1], [0, 0, 1, 1], [], []>} : vector<8x896xf32>, vector<896x128xf32>, vector<8x128xf32> -> vector<8x128xf32>
    %c0_3 = arith.constant 0 : index
    %c0_4 = arith.constant 0 : index
    %3 = vector.load %arg3[%c0_3, %c0_4] : memref<1x128xf32, #tpu.memory_space<vmem>>, vector<1x128xf32>
    %4 = vector.broadcast %3 : vector<1x128xf32> to vector<8x128xf32>
    %5 = arith.addf %2, %4 : vector<8x128xf32>
    %c0_5 = arith.constant 0 : index
    %c0_6 = arith.constant 0 : index
    %6 = vector.load %arg4[%c0_5, %c0_6] : memref<8x128xf32, #tpu.memory_space<vmem>>, vector<8x128xf32>
    tpu.vector_store %arg4[%c0_5, %c0_6], %5 {strides = array<i32>} : memref<8x128xf32, #tpu.memory_space<vmem>>, vector<8x128xf32>,
    return
  }
  func.func @transform_0(%arg0: i32) -> (i32, i32) {
    %c0_i32 = arith.constant 0 : i32
    %c0_i32_0 = arith.constant 0 : i32
    return %arg0, %c0_i32 : i32, i32
  }
  func.func @transform_1(%arg0: i32) -> (i32, i32) {
    %c0_i32 = arith.constant 0 : i32
    %c0_i32_0 = arith.constant 0 : i32
    %c0_i32_1 = arith.constant 0 : i32
    return %c0_i32, %c0_i32_0 : i32, i32
  }
  func.func @transform_2(%arg0: i32) -> (i32, i32) {
    %c0_i32 = arith.constant 0 : i32
    %c0_i32_0 = arith.constant 0 : i32
    %c0_i32_1 = arith.constant 0 : i32
    return %c0_i32, %c0_i32_0 : i32, i32
  }
  func.func @transform_3(%arg0: i32) -> (i32, i32) {
    %c0_i32 = arith.constant 0 : i32
    %c0_i32_0 = arith.constant 0 : i32
    return %arg0, %c0_i32 : i32, i32
  }
}

</mosaic_0001>

<llo_original>
// kernel: net_forward.1
$region0: #{net_forward.1}
  #allocation0 [shape = 'u32[]', space=smem, size = 0x4, offset = 0x4, fixed_abs, tag = 'smem constant byte address 0x4 - core index']
  #allocation1 [shape = 'u32[72,128]{1,0:T(1,128)}', space=vmem, size = 0x9000, scoped, tag = 'internal scratch']
  %s0 = inlined_call_operand.vmem [shape: f32[8,896], index: 0, kind: input, shape index: {}]
  %s1 = inlined_call_operand.hbm [shape: f32[896,128], index: 1, kind: input, shape index: {}]
  %s2 = inlined_call_operand.vmem [shape: f32[1,128], index: 2, kind: input, shape index: {}]
  %s3 = inlined_call_operand.vmem [shape: f32[8,128], index: 3, kind: output, shape index: {}]
  %s4 = sld [smem:[#allocation0]]
  $region26: #{net_forward.1} parent=0
    _
  %s6 = ssub.s32 1, %s4
  %s7 = scalar_select 0, %s6, %s4
  $region1: #{net_forward.1} parent=0
    #allocation2 [shape = 'u8[458752]{0}', space=vmem, size = 0x70000, scoped, tag = 'input window, operand 1, single buffered']
    #allocation3 [shape = 's32[1]{0}', space=sflag, size = 0x4, scoped, tag = 'scoped memory for net_forward.1']
    %8 = vsyncpa [#allocation3], 0
    // Predicated region
    $region2: #{net_forward.1} parent=1 // pred_check
      _
    $region3: #{net_forward.1} parent=1 // pred_check_branch
      %10 = sbr.rel (0) target = $region5
    $region4: #{net_forward.1} parent=1 // pred_region
      _
    $region5: #{net_forward.1} parent=1 // pred_fallthru
      _
    // Predicated region
    $region6: #{net_forward.1} parent=1 // pred_check
      _
    $region7: #{net_forward.1} parent=1 // pred_check_branch
      %12 = sbr.rel (0) target = $region9
    $region8: #{net_forward.1} parent=1 // pred_region
      %14 = vsyncadd [#allocation3], 0
      %s15 = sshll.u32 %s1, 4
      %s16 = int_to_ptr.hbm [resolvable:$true] %s15
      %s17 = sshll.u32 [#allocation2], 4
      %s18 = int_to_ptr.vmem [resolvable:$true] %s17
      %23 = dma.hbm_to_vmem [thread:$0]  %s16, 14336, %s18, [#allocation3], 128, 128, 8
    $region9: #{net_forward.1} parent=1 // pred_fallthru
      _
    // Predicated region
    $region10: #{net_forward.1} parent=1 // pred_check
      _
    $region11: #{net_forward.1} parent=1 // pred_check_branch
      %25 = sbr.rel (0) target = $region13
    $region12: #{net_forward.1} parent=1 // pred_region
      _
    $region13: #{net_forward.1} parent=1 // pred_fallthru
      _
    // Predicated region
    $region14: #{net_forward.1} parent=1 // pred_check
      _
    $region15: #{net_forward.1} parent=1 // pred_check_branch
      %27 = sbr.rel (0) target = $region17
    $region16: #{net_forward.1} parent=1 // pred_region
      %29 = dma.done [#allocation3], 14336
    $region17: #{net_forward.1} parent=1 // pred_fallthru
      _
    %v30 = vld [vmem:[%s0] sm:$0xff]
    %v31 = vld [vmem:[%s0 + $0x8] sm:$0xff]
    %v32 = vld [vmem:[%s0 + $0x10] sm:$0xff]
    %v33 = vld [vmem:[%s0 + $0x18] sm:$0xff]
    %v34 = vld [vmem:[%s0 + $0x20] sm:$0xff]
    %v35 = vld [vmem:[%s0 + $0x28] sm:$0xff]
    %v36 = vld [vmem:[%s0 + $0x30] sm:$0xff]
    %v37 = vld [vmem:[#allocation2] sm:$0xff]
    %v38 = vld [vmem:[#allocation2 + $0x8] sm:$0xff]
    %v39 = vld [vmem:[#allocation2 + $0x10] sm:$0xff]
    %v40 = vld [vmem:[#allocation2 + $0x18] sm:$0xff]
    %v41 = vld [vmem:[#allocation2 + $0x20] sm:$0xff]
    %v42 = vld [vmem:[#allocation2 + $0x28] sm:$0xff]
    %v43 = vld [vmem:[#allocation2 + $0x30] sm:$0xff]
    %v44 = vld [vmem:[#allocation2 + $0x38] sm:$0xff]
    %v45 = vld [vmem:[#allocation2 + $0x40] sm:$0xff]
    %v46 = vld [vmem:[#allocation2 + $0x48] sm:$0xff]
    %v47 = vld [vmem:[#allocation2 + $0x50] sm:$0xff]
    %v48 = vld [vmem:[#allocation2 + $0x58] sm:$0xff]
    %v49 = vld [vmem:[#allocation2 + $0x60] sm:$0xff]
    %v50 = vld [vmem:[#allocation2 + $0x68] sm:$0xff]
    %v51 = vld [vmem:[#allocation2 + $0x70] sm:$0xff]
    %v52 = vld [vmem:[#allocation2 + $0x78] sm:$0xff]
    %v53 = vld [vmem:[#allocation2 + $0x80] sm:$0xff]
    %v54 = vld [vmem:[#allocation2 + $0x88] sm:$0xff]
    %v55 = vld [vmem:[#allocation2 + $0x90] sm:$0xff]
    %v56 = vld [vmem:[#allocation2 + $0x98] sm:$0xff]
    %v57 = vld [vmem:[#allocation2 + $0xa0] sm:$0xff]
    %v58 = vld [vmem:[#allocation2 + $0xa8] sm:$0xff]
    %v59 = vld [vmem:[#allocation2 + $0xb0] sm:$0xff]
    %v60 = vld [vmem:[#allocation2 + $0xb8] sm:$0xff]
    %v61 = vld [vmem:[#allocation2 + $0xc0] sm:$0xff]
    %v62 = vld [vmem:[#allocation2 + $0xc8] sm:$0xff]
    %v63 = vld [vmem:[#allocation2 + $0xd0] sm:$0xff]
    %v64 = vld [vmem:[#allocation2 + $0xd8] sm:$0xff]
    %v65 = vld [vmem:[#allocation2 + $0xe0] sm:$0xff]
    %v66 = vld [vmem:[#allocation2 + $0xe8] sm:$0xff]
    %v67 = vld [vmem:[#allocation2 + $0xf0] sm:$0xff]
    %v68 = vld [vmem:[#allocation2 + $0xf8] sm:$0xff]
    %v69 = vld [vmem:[#allocation2 + $0x100] sm:$0xff]
    %v70 = vld [vmem:[#allocation2 + $0x108] sm:$0xff]
    %v71 = vld [vmem:[#allocation2 + $0x110] sm:$0xff]
    %v72 = vld [vmem:[#allocation2 + $0x118] sm:$0xff]
    %v73 = vld [vmem:[#allocation2 + $0x120] sm:$0xff]
    %v74 = vld [vmem:[#allocation2 + $0x128] sm:$0xff]
    %v75 = vld [vmem:[#allocation2 + $0x130] sm:$0xff]
    %v76 = vld [vmem:[#allocation2 + $0x138] sm:$0xff]
    %v77 = vld [vmem:[#allocation2 + $0x140] sm:$0xff]
    %v78 = vld [vmem:[#allocation2 + $0x148] sm:$0xff]
    %v79 = vld [vmem:[#allocation2 + $0x150] sm:$0xff]
    %v80 = vld [vmem:[#allocation2 + $0x158] sm:$0xff]
    %v81 = vld [vmem:[#allocation2 + $0x160] sm:$0xff]
    %v82 = vld [vmem:[#allocation2 + $0x168] sm:$0xff]
    %v83 = vld [vmem:[#allocation2 + $0x170] sm:$0xff]
    %v84 = vld [vmem:[#allocation2 + $0x178] sm:$0xff]
    %v85 = vld [vmem:[#allocation2 + $0x180] sm:$0xff]
    %v86 = vld [vmem:[#allocation2 + $0x188] sm:$0xff]
    %v87 = vld [vmem:[#allocation2 + $0x190] sm:$0xff]
    %v88 = vld [vmem:[#allocation2 + $0x198] sm:$0xff]
    %v89 = vld [vmem:[#allocation2 + $0x1a0] sm:$0xff]
    %v90 = vld [vmem:[#allocation2 + $0x1a8] sm:$0xff]
    %v91 = vld [vmem:[#allocation2 + $0x1b0] sm:$0xff]
    %v92 = vld [vmem:[#allocation2 + $0x1b8] sm:$0xff]
    %v93 = vld [vmem:[#allocation2 + $0x1c0] sm:$0xff]
    %v94 = vld [vmem:[#allocation2 + $0x1c8] sm:$0xff]
    %v95 = vld [vmem:[#allocation2 + $0x1d0] sm:$0xff]
    %v96 = vld [vmem:[#allocation2 + $0x1d8] sm:$0xff]
    %v97 = vld [vmem:[#allocation2 + $0x1e0] sm:$0xff]
    %v98 = vld [vmem:[#allocation2 + $0x1e8] sm:$0xff]
    %v99 = vld [vmem:[#allocation2 + $0x1f0] sm:$0xff]
    %v100 = vld [vmem:[#allocation2 + $0x1f8] sm:$0xff]
    %v101 = vld [vmem:[#allocation2 + $0x200] sm:$0xff]
    %v102 = vld [vmem:[#allocation2 + $0x208] sm:$0xff]
    %v103 = vld [vmem:[#allocation2 + $0x210] sm:$0xff]
    %v104 = vld [vmem:[#allocation2 + $0x218] sm:$0xff]
    %v105 = vld [vmem:[#allocation2 + $0x220] sm:$0xff]
    %v106 = vld [vmem:[#allocation2 + $0x228] sm:$0xff]
    %v107 = vld [vmem:[#allocation2 + $0x230] sm:$0xff]
    %v108 = vld [vmem:[#allocation2 + $0x238] sm:$0xff]
    %v109 = vld [vmem:[#allocation2 + $0x240] sm:$0xff]
    %v110 = vld [vmem:[#allocation2 + $0x248] sm:$0xff]
    %v111 = vld [vmem:[#allocation2 + $0x250] sm:$0xff]
    %v112 = vld [vmem:[#allocation2 + $0x258] sm:$0xff]
    %v113 = vld [vmem:[#allocation2 + $0x260] sm:$0xff]
    %v114 = vld [vmem:[#allocation2 + $0x268] sm:$0xff]
    %v115 = vld [vmem:[#allocation2 + $0x270] sm:$0xff]
    %v116 = vld [vmem:[#allocation2 + $0x278] sm:$0xff]
    %v117 = vld [vmem:[#allocation2 + $0x280] sm:$0xff]
    %v118 = vld [vmem:[#allocation2 + $0x288] sm:$0xff]
    %v119 = vld [vmem:[#allocation2 + $0x290] sm:$0xff]
    %v120 = vld [vmem:[#allocation2 + $0x298] sm:$0xff]
    %v121 = vld [vmem:[#allocation2 + $0x2a0] sm:$0xff]
    %v122 = vld [vmem:[#allocation2 + $0x2a8] sm:$0xff]
    %v123 = vld [vmem:[#allocation2 + $0x2b0] sm:$0xff]
    %v124 = vld [vmem:[#allocation2 + $0x2b8] sm:$0xff]
    %v125 = vld [vmem:[#allocation2 + $0x2c0] sm:$0xff]
    %v126 = vld [vmem:[#allocation2 + $0x2c8] sm:$0xff]
    %v127 = vld [vmem:[#allocation2 + $0x2d0] sm:$0xff]
    %v128 = vld [vmem:[#allocation2 + $0x2d8] sm:$0xff]
    %v129 = vld [vmem:[#allocation2 + $0x2e0] sm:$0xff]
    %v130 = vld [vmem:[#allocation2 + $0x2e8] sm:$0xff]
    %v131 = vld [vmem:[#allocation2 + $0x2f0] sm:$0xff]
    %v132 = vld [vmem:[#allocation2 + $0x2f8] sm:$0xff]
    %v133 = vld [vmem:[#allocation2 + $0x300] sm:$0xff]
    %v134 = vld [vmem:[#allocation2 + $0x308] sm:$0xff]
    %v135 = vld [vmem:[#allocation2 + $0x310] sm:$0xff]
    %v136 = vld [vmem:[#allocation2 + $0x318] sm:$0xff]
    %v137 = vld [vmem:[#allocation2 + $0x320] sm:$0xff]
    %v138 = vld [vmem:[#allocation2 + $0x328] sm:$0xff]
    %v139 = vld [vmem:[#allocation2 + $0x330] sm:$0xff]
    %v140 = vld [vmem:[#allocation2 + $0x338] sm:$0xff]
    %v141 = vld [vmem:[#allocation2 + $0x340] sm:$0xff]
    %v142 = vld [vmem:[#allocation2 + $0x348] sm:$0xff]
    %v143 = vld [vmem:[#allocation2 + $0x350] sm:$0xff]
    %v144 = vld [vmem:[#allocation2 + $0x358] sm:$0xff]
    %v145 = vld [vmem:[#allocation2 + $0x360] sm:$0xff]
    %v146 = vld [vmem:[#allocation2 + $0x368] sm:$0xff]
    %v147 = vld [vmem:[#allocation2 + $0x370] sm:$0xff]
    %v148 = vld [vmem:[#allocation2 + $0x378] sm:$0xff]
    %v149 = vld [vmem:[%s2] sm:$0x1]
    %v151 = vperm.slane %v149, 0
    %153 = vmatpush.msra.mxu0 %v52
    %154 = vmatpush.msra.mxu0 %v51
    %155 = vmatpush.msra.mxu0 %v50
    %156 = vmatpush.msra.mxu0 %v49
    %157 = vmatpush.msra.mxu0 %v48
    %158 = vmatpush.msra.mxu0 %v47
    %159 = vmatpush.msra.mxu0 %v46
    %160 = vmatpush.msra.mxu0 %v45
    %161 = vmatpush.msra.mxu0 %v44
    %162 = vmatpush.msra.mxu0 %v43
    %163 = vmatpush.msra.mxu0 %v42
    %164 = vmatpush.msra.mxu0 %v41
    %165 = vmatpush.msra.mxu0 %v40
    %166 = vmatpush.msra.mxu0 %v39
    %167 = vmatpush.msra.mxu0 %v38
    %168 = vmatpush.msra.mxu0 %v37
    %169 = vmatmul.f32.gmra.mxu0 %v30
    %v170 = vpop.f32.mrf.mxu0
    %v171 = vadd.f32 %v151, %v170
    %172 = vdwg.mxu0
    %173 = vmatpush.msra.mxu0 %v68
    %174 = vmatpush.msra.mxu0 %v67
    %175 = vmatpush.msra.mxu0 %v66
    %176 = vmatpush.msra.mxu0 %v65
    %177 = vmatpush.msra.mxu0 %v64
    %178 = vmatpush.msra.mxu0 %v63
    %179 = vmatpush.msra.mxu0 %v62
    %180 = vmatpush.msra.mxu0 %v61
    %181 = vmatpush.msra.mxu0 %v60
    %182 = vmatpush.msra.mxu0 %v59
    %183 = vmatpush.msra.mxu0 %v58
    %184 = vmatpush.msra.mxu0 %v57
    %185 = vmatpush.msra.mxu0 %v56
    %186 = vmatpush.msra.mxu0 %v55
    %187 = vmatpush.msra.mxu0 %v54
    %188 = vmatpush.msra.mxu0 %v53
    %189 = vmatmul.f32.gmra.mxu0 %v31
    %v190 = vpop.f32.mrf.mxu0
    %v191 = vadd.f32 %v171, %v190
    %192 = vdwg.mxu0
    %193 = vmatpush.msra.mxu0 %v84
    %194 = vmatpush.msra.mxu0 %v83
    %195 = vmatpush.msra.mxu0 %v82
    %196 = vmatpush.msra.mxu0 %v81
    %197 = vmatpush.msra.mxu0 %v80
    %198 = vmatpush.msra.mxu0 %v79
    %199 = vmatpush.msra.mxu0 %v78
    %200 = vmatpush.msra.mxu0 %v77
    %201 = vmatpush.msra.mxu0 %v76
    %202 = vmatpush.msra.mxu0 %v75
    %203 = vmatpush.msra.mxu0 %v74
    %204 = vmatpush.msra.mxu0 %v73
    %205 = vmatpush.msra.mxu0 %v72
    %206 = vmatpush.msra.mxu0 %v71
    %207 = vmatpush.msra.mxu0 %v70
    %208 = vmatpush.msra.mxu0 %v69
    %209 = vmatmul.f32.gmra.mxu0 %v32
    %v210 = vpop.f32.mrf.mxu0
    %v211 = vadd.f32 %v191, %v210
    %212 = vdwg.mxu0
    %213 = vmatpush.msra.mxu0 %v100
    %214 = vmatpush.msra.mxu0 %v99
    %215 = vmatpush.msra.mxu0 %v98
    %216 = vmatpush.msra.mxu0 %v97
    %217 = vmatpush.msra.mxu0 %v96
    %218 = vmatpush.msra.mxu0 %v95
    %219 = vmatpush.msra.mxu0 %v94
    %220 = vmatpush.msra.mxu0 %v93
    %221 = vmatpush.msra.mxu0 %v92
    %222 = vmatpush.msra.mxu0 %v91
    %223 = vmatpush.msra.mxu0 %v90
    %224 = vmatpush.msra.mxu0 %v89
    %225 = vmatpush.msra.mxu0 %v88
    %226 = vmatpush.msra.mxu0 %v87
    %227 = vmatpush.msra.mxu0 %v86
    %228 = vmatpush.msra.mxu0 %v85
    %229 = vmatmul.f32.gmra.mxu0 %v33
    %v230 = vpop.f32.mrf.mxu0
    %v231 = vadd.f32 %v211, %v230
    %232 = vdwg.mxu0
    %233 = vmatpush.msra.mxu0 %v116
    %234 = vmatpush.msra.mxu0 %v115
    %235 = vmatpush.msra.mxu0 %v114
    %236 = vmatpush.msra.mxu0 %v113
    %237 = vmatpush.msra.mxu0 %v112
    %238 = vmatpush.msra.mxu0 %v111
    %239 = vmatpush.msra.mxu0 %v110
    %240 = vmatpush.msra.mxu0 %v109
    %241 = vmatpush.msra.mxu0 %v108
    %242 = vmatpush.msra.mxu0 %v107
    %243 = vmatpush.msra.mxu0 %v106
    %244 = vmatpush.msra.mxu0 %v105
    %245 = vmatpush.msra.mxu0 %v104
    %246 = vmatpush.msra.mxu0 %v103
    %247 = vmatpush.msra.mxu0 %v102
    %248 = vmatpush.msra.mxu0 %v101
    %249 = vmatmul.f32.gmra.mxu0 %v34
    %v250 = vpop.f32.mrf.mxu0
    %v251 = vadd.f32 %v231, %v250
    %252 = vdwg.mxu0
    %253 = vmatpush.msra.mxu0 %v132
    %254 = vmatpush.msra.mxu0 %v131
    %255 = vmatpush.msra.mxu0 %v130
    %256 = vmatpush.msra.mxu0 %v129
    %257 = vmatpush.msra.mxu0 %v128
    %258 = vmatpush.msra.mxu0 %v127
    %259 = vmatpush.msra.mxu0 %v126
    %260 = vmatpush.msra.mxu0 %v125
    %261 = vmatpush.msra.mxu0 %v124
    %262 = vmatpush.msra.mxu0 %v123
    %263 = vmatpush.msra.mxu0 %v122
    %264 = vmatpush.msra.mxu0 %v121
    %265 = vmatpush.msra.mxu0 %v120
    %266 = vmatpush.msra.mxu0 %v119
    %267 = vmatpush.msra.mxu0 %v118
    %268 = vmatpush.msra.mxu0 %v117
    %269 = vmatmul.f32.gmra.mxu0 %v35
    %v270 = vpop.f32.mrf.mxu0
    %v271 = vadd.f32 %v251, %v270
    %272 = vdwg.mxu0
    %273 = vmatpush.msra.mxu0 %v148
    %274 = vmatpush.msra.mxu0 %v147
    %275 = vmatpush.msra.mxu0 %v146
    %276 = vmatpush.msra.mxu0 %v145
    %277 = vmatpush.msra.mxu0 %v144
    %278 = vmatpush.msra.mxu0 %v143
    %279 = vmatpush.msra.mxu0 %v142
    %280 = vmatpush.msra.mxu0 %v141
    %281 = vmatpush.msra.mxu0 %v140
    %282 = vmatpush.msra.mxu0 %v139
    %283 = vmatpush.msra.mxu0 %v138
    %284 = vmatpush.msra.mxu0 %v137
    %285 = vmatpush.msra.mxu0 %v136
    %286 = vmatpush.msra.mxu0 %v135
    %287 = vmatpush.msra.mxu0 %v134
    %288 = vmatpush.msra.mxu0 %v133
    %289 = vmatmul.f32.gmra.mxu0 %v36
    %v290 = vpop.f32.mrf.mxu0
    %v291 = vadd.f32 %v271, %v290
    %292 = vdwg.mxu0
    %293 = vst [vmem:[%s3] sm:$0xff] %v291
    // Predicated region
    $region18: #{net_forward.1} parent=1 // pred_check
      _
    $region19: #{net_forward.1} parent=1 // pred_check_branch
      %295 = sbr.rel (0) target = $region21
    $region20: #{net_forward.1} parent=1 // pred_region
      _
    $region21: #{net_forward.1} parent=1 // pred_fallthru
      _
    // Predicated region
    $region22: #{net_forward.1} parent=1 // pred_check
      _
    $region23: #{net_forward.1} parent=1 // pred_check_branch
      %297 = sbr.rel (0) target = $region25
    $region24: #{net_forward.1} parent=1 // pred_region
      _
    $region25: #{net_forward.1} parent=1 // pred_fallthru
      _
    %298 = vsyncpa [#allocation3], 1

</llo_original>
